<compile_context>
chip_gen: v5e
topology: v5e:2x2
jax: 0.10.0
libtpu: 0.0.40
codegen_flags: <defaults>
</compile_context>

<pallas_src>
import functools

import jax
import jax.numpy as jnp
from jax.experimental import pallas as pl
from jax.experimental.pallas import tpu as pltpu

_LANES = 128
_EPS = 1e-12


def _round_up(x, m):
    return (x + m - 1) // m * m


# ----------------------------- fused kernel ---------------------------------


def _gcn_fused_kernel(adj_ref, r_adj_ref, adj_rs_ref, r_adj_rs_ref, x_ref,
                      *rest, layer_meta, compute_dtype):
    """rest = (w0, b0, w1, b1, ..., o_ref).

    layer_meta[i] = (in_dim, out_dim_padded, relu).  Weights/adjacencies are
    already stored in compute_dtype; biases / row-sums are f32.
    """
    num_layers = len(layer_meta)
    w_refs = rest[0:2 * num_layers:2]
    b_refs = rest[1:2 * num_layers:2]
    o_ref = rest[2 * num_layers]

    h = x_ref[...].astype(compute_dtype)          # activation in compute dtype
    graph_side = True
    for i, (c_in, c_out, relu) in enumerate(layer_meta):
        a = (adj_ref if graph_side else r_adj_ref)[...]          # bf16
        rs = (adj_rs_ref if graph_side else r_adj_rs_ref)[...]   # f32 (N, 1)
        w = w_refs[i][...]                                       # bf16
        b = b_refs[i][...]                                        # f32 (1, C)

        if c_in < c_out:
            # (adj @ h) @ W + rowsum(adj) * b   ==  adj @ (h @ W + b)
            # (N^2 contraction runs over the narrower input side)
            ah = jnp.dot(a, h, preferred_element_type=jnp.float32)
            out = jnp.dot(ah.astype(compute_dtype), w,
                          preferred_element_type=jnp.float32)
            out = out + rs * b
        else:
            support = jnp.dot(h, w, preferred_element_type=jnp.float32) + b
            out = jnp.dot(a, support.astype(compute_dtype),
                          preferred_element_type=jnp.float32)

        if relu:
            # nn.LeakyReLU(negative_slope=0.2), in f32
            out = jnp.where(out > 0, out, 0.2 * out)

        # Carry bf16 between layers; keep the final layer output in f32 for
        # the normalize epilogue.
        h = out.astype(compute_dtype) if i + 1 < num_layers else out
        graph_side = not graph_side

    # F.normalize(x): row-wise L2, p=2, dim=1, eps=1e-12.
    # sqrt(max(sumsq, eps^2)) == max(||x||, eps); rsqrt lowers to the EUP.
    sumsq = jnp.sum(h * h, axis=1, keepdims=True)
    inv_norm = jax.lax.rsqrt(jnp.maximum(sumsq, _EPS * _EPS))
    o_ref[...] = (h * inv_norm).astype(o_ref.dtype)


# ------------------------------- wrapper -------------------------------------


def gcn_dense_forward(x, model):
    """Fused GCN_Dense forward: all layers + final F.normalize in one kernel."""
    n = x.shape[0]
    layer_meta = model["layer_meta"]
    c_out_pad_last = layer_meta[-1][1]
    max_c_pad = max(m[1] for m in layer_meta)

    inputs = [model["adj"], model["r_adj"], model["adj_rs"],
              model["r_adj_rs"], x] + list(model["wb"])

    # Explicit scoped-VMEM budget: operands + output + activation temporaries,
    # with headroom, clamped to a generation-aware ceiling.
    raw = sum(int(a.size) * a.dtype.itemsize for a in inputs)
    raw += n * c_out_pad_last * 4                 # output buffer
    raw += 4 * n * max_c_pad * 4                  # in-kernel f32 temporaries
    try:
        cap = getattr(pltpu.get_tpu_info(), "vmem_capacity_bytes", 64 << 20)
    except Exception:  # pragma: no cover - conservative fallback
        cap = 64 << 20
    ceiling = int(cap * 0.8)
    vmem_limit = int(min(ceiling, max(2 * raw, 32 << 20)))

    kernel = functools.partial(_gcn_fused_kernel,
                               layer_meta=layer_meta,
                               compute_dtype=model["compute_dtype"])

    # No grid => single resident copy of every operand (no double buffering).
    vmem_spec = pl.BlockSpec(memory_space=pltpu.MemorySpace.VMEM)

    out_padded = pl.pallas_call(
        kernel,
        out_shape=jax.ShapeDtypeStruct((n, c_out_pad_last), jnp.float32),
        in_specs=[vmem_spec] * len(inputs),
        out_specs=vmem_spec,
        compiler_params=pltpu.CompilerParams(vmem_limit_bytes=vmem_limit),
    )(*inputs)

    return out_padded[:, :model["out_channels"]]


# ---------------- graph / parameter construction (plain JAX glue) -----------


def build_dense_adj(edges, n):
    """Dense COO adjacency A[row, col] += 1."""
    edges = jnp.asarray(edges, dtype=jnp.int32)
    a = jnp.zeros((n, n), jnp.float32)
    a = a.at[edges[:, 0], edges[:, 1]].add(1.0)
    return a


def row_normalize(m):
    """D^{-1} m with 1/0 -> 0 (normt_spm 'in' after the transpose)."""
    rowsum = jnp.sum(m, axis=1, keepdims=True)
    r_inv = jnp.where(rowsum == 0.0, 0.0, 1.0 / rowsum)
    return m * r_inv


def xavier_uniform(key, fan_in, fan_out):
    bound = (6.0 / (fan_in + fan_out)) ** 0.5
    return jax.random.uniform(key, (fan_in, fan_out), jnp.float32,
                              minval=-bound, maxval=bound)


def init_gcn_dense(key, n, edges, in_channels, out_channels, hidden_layers,
                   *, compute_dtype=jnp.bfloat16):
    """Mirrors GCN_Dense.__init__ for hidden_layers spec like 'd32' or '32,d'.

    Returns a cached "model" dict: bf16 adjacencies, exact f32 row-sums,
    per-layer padded bf16 weights + f32 biases, and static layer metadata.
    All padding / casting happens here, once, not per forward call.
    """
    a = build_dense_adj(edges, n)
    adj_f32 = row_normalize(a.T)      # self.adj  = normt_spm(adj, 'in')
    r_adj_f32 = row_normalize(a)      # self.r_adj = normt_spm(adj.T, 'in')

    # Exact row sums of the row-normalized adjacencies (1.0 or 0.0 per row),
    # cached once; needed to keep the reordered matmul exactly equal to
    # adj @ (xW + b).
    adj_rs = jnp.sum(adj_f32, axis=1, keepdims=True)       # (N, 1) f32
    r_adj_rs = jnp.sum(r_adj_f32, axis=1, keepdims=True)   # (N, 1) f32

    hl = hidden_layers.split(',')
    if hl[-1] == 'd':
        hl = hl[:-1]
    layer_sizes = []
    last_c = in_channels
    for c in hl:
        if c[0] == 'd':
            c = c[1:]
        c = int(c)
        layer_sizes.append((last_c, c, True))          # relu=True
        last_c = c
    layer_sizes.append((last_c, out_channels, False))  # last layer: relu=False

    wb = []
    layer_meta = []
    in_dim = in_channels   # actual stored width of h entering layer 0 (raw x)
    for (cin, cout, relu) in layer_sizes:
        key, sub = jax.random.split(key)
        w = xavier_uniform(sub, cin, cout)
        b = jnp.zeros((cout,), jnp.float32)            # module init: zeros
        cout_pad = _round_up(max(cout, _LANES), _LANES)
        w_p = jnp.zeros((in_dim, cout_pad), jnp.float32).at[:cin, :cout].set(w)
        b_p = jnp.zeros((1, cout_pad), jnp.float32).at[:, :cout].set(
            jnp.reshape(b, (1, -1)))
        wb += [w_p.astype(compute_dtype), b_p]
        layer_meta.append((in_dim, cout_pad, bool(relu)))
        in_dim = cout_pad

    return dict(
        adj=adj_f32.astype(compute_dtype),
        r_adj=r_adj_f32.astype(compute_dtype),
        adj_rs=adj_rs,
        r_adj_rs=r_adj_rs,
        wb=tuple(wb),
        layer_meta=tuple(layer_meta),
        out_channels=out_channels,
        compute_dtype=compute_dtype,
    )


# -------------------------------- demo --------------------------------------


if __name__ == "__main__":
    n = 64
    in_channels = 16
    out_channels = 8
    hidden_layers = "d32"   # one hidden GraphConv of width 32 (dropout flag)

    # deterministic edge set: self-loops + ring
    edges = [(i, i) for i in range(n)] + [(i, (i + 1) % n) for i in range(n)]

    key = jax.random.PRNGKey(0)
    key, pkey, xkey = jax.random.split(key, 3)

    model = init_gcn_dense(pkey, n, edges, in_channels, out_channels,
                           hidden_layers)

    x = jax.random.normal(xkey, (n, in_channels), jnp.float32)

    out = gcn_dense_forward(x, model)
    out = jax.block_until_ready(out)

    assert out.shape == (n, out_channels)
    assert out.dtype == jnp.float32
    assert bool(jnp.all(jnp.isfinite(out)))
    # F.normalize epilogue: every row should be (approximately) unit norm.
    norms = jnp.linalg.norm(out, axis=1)
    assert bool(jnp.all(jnp.abs(norms - 1.0) < 1e-3))
    print("KERNEL_OK")
</pallas_src>

<mosaic_0001>
module attributes {stable_mosaic.version = 11 : i64} {
  func.func @_gcn_fused_kernel(%arg0: memref<64x64xbf16, #tpu.memory_space<vmem>>, %arg1: memref<64x64xbf16, #tpu.memory_space<vmem>>, %arg2: memref<64x1xf32, #tpu.memory_space<vmem>>, %arg3: memref<64x1xf32, #tpu.memory_space<vmem>>, %arg4: memref<64x16xf32, #tpu.memory_space<vmem>>, %arg5: memref<16x128xbf16, #tpu.memory_space<vmem>>, %arg6: memref<1x128xf32, #tpu.memory_space<vmem>>, %arg7: memref<128x128xbf16, #tpu.memory_space<vmem>>, %arg8: memref<1x128xf32, #tpu.memory_space<vmem>>, %arg9: memref<64x128xf32, #tpu.memory_space<vmem>>) attributes {dimension_semantics = [], scalar_prefetch = 0 : i64, scratch_operands = 0 : i64, tpu.core_type = #tpu.core_type<tc>} {
    %c0 = arith.constant 0 : index
    %c0_0 = arith.constant 0 : index
    %0 = vector.load %arg4[%c0, %c0_0] : memref<64x16xf32, #tpu.memory_space<vmem>>, vector<64x16xf32>
    %1 = arith.truncf %0 : vector<64x16xf32> to vector<64x16xbf16>
    %c0_1 = arith.constant 0 : index
    %c0_2 = arith.constant 0 : index
    %2 = vector.load %arg0[%c0_1, %c0_2] : memref<64x64xbf16, #tpu.memory_space<vmem>>, vector<64x64xbf16>
    %c0_3 = arith.constant 0 : index
    %c0_4 = arith.constant 0 : index
    %3 = vector.load %arg2[%c0_3, %c0_4] : memref<64x1xf32, #tpu.memory_space<vmem>>, vector<64x1xf32>
    %c0_5 = arith.constant 0 : index
    %c0_6 = arith.constant 0 : index
    %4 = vector.load %arg5[%c0_5, %c0_6] : memref<16x128xbf16, #tpu.memory_space<vmem>>, vector<16x128xbf16>
    %c0_7 = arith.constant 0 : index
    %c0_8 = arith.constant 0 : index
    %5 = vector.load %arg6[%c0_7, %c0_8] : memref<1x128xf32, #tpu.memory_space<vmem>>, vector<1x128xf32>
    %cst = arith.constant dense<0.000000e+00> : vector<64x16xf32>
    %6 = tpu.matmul %2, %1, %cst {dimension_numbers = #tpu.dot_dimension_numbers<[1], [0], [0], [1], [0, 0, 1, 1], [], []>} : vector<64x64xbf16>, vector<64x16xbf16>, vector<64x16xf32> -> vector<64x16xf32>
    %7 = arith.truncf %6 : vector<64x16xf32> to vector<64x16xbf16>
    %cst_9 = arith.constant dense<0.000000e+00> : vector<64x128xf32>
    %8 = tpu.matmul %7, %4, %cst_9 {dimension_numbers = #tpu.dot_dimension_numbers<[1], [0], [0], [1], [0, 0, 1, 1], [], []>} : vector<64x16xbf16>, vector<16x128xbf16>, vector<64x128xf32> -> vector<64x128xf32>
    %9 = vector.broadcast %3 : vector<64x1xf32> to vector<64x128xf32>
    %10 = vector.broadcast %5 : vector<1x128xf32> to vector<64x128xf32>
    %11 = arith.mulf %9, %10 : vector<64x128xf32>
    %12 = arith.addf %8, %11 : vector<64x128xf32>
    %cst_10 = arith.constant 0.000000e+00 : f32
    %13 = vector.broadcast %cst_10 : f32 to vector<64x128xf32>
    %14 = arith.cmpf ogt, %12, %13 : vector<64x128xf32>
    %cst_11 = arith.constant 2.000000e-01 : f32
    %15 = vector.broadcast %cst_11 : f32 to vector<64x128xf32>
    %16 = arith.mulf %15, %12 : vector<64x128xf32>
    %17 = arith.select %14, %12, %16 : vector<64x128xi1>, vector<64x128xf32>
    %18 = arith.truncf %17 : vector<64x128xf32> to vector<64x128xbf16>
    %c0_12 = arith.constant 0 : index
    %c0_13 = arith.constant 0 : index
    %19 = vector.load %arg1[%c0_12, %c0_13] : memref<64x64xbf16, #tpu.memory_space<vmem>>, vector<64x64xbf16>
    %c0_14 = arith.constant 0 : index
    %c0_15 = arith.constant 0 : index
    %20 = vector.load %arg7[%c0_14, %c0_15] : memref<128x128xbf16, #tpu.memory_space<vmem>>, vector<128x128xbf16>
    %c0_16 = arith.constant 0 : index
    %c0_17 = arith.constant 0 : index
    %21 = vector.load %arg8[%c0_16, %c0_17] : memref<1x128xf32, #tpu.memory_space<vmem>>, vector<1x128xf32>
    %cst_18 = arith.constant dense<0.000000e+00> : vector<64x128xf32>
    %22 = tpu.matmul %18, %20, %cst_18 {dimension_numbers = #tpu.dot_dimension_numbers<[1], [0], [0], [1], [0, 0, 1, 1], [], []>} : vector<64x128xbf16>, vector<128x128xbf16>, vector<64x128xf32> -> vector<64x128xf32>
    %23 = vector.broadcast %21 : vector<1x128xf32> to vector<64x128xf32>
    %24 = arith.addf %22, %23 : vector<64x128xf32>
    %25 = arith.truncf %24 : vector<64x128xf32> to vector<64x128xbf16>
    %cst_19 = arith.constant dense<0.000000e+00> : vector<64x128xf32>
    %26 = tpu.matmul %19, %25, %cst_19 {dimension_numbers = #tpu.dot_dimension_numbers<[1], [0], [0], [1], [0, 0, 1, 1], [], []>} : vector<64x64xbf16>, vector<64x128xbf16>, vector<64x128xf32> -> vector<64x128xf32>
    %27 = arith.mulf %26, %26 : vector<64x128xf32>
    %cst_20 = arith.constant dense<0.000000e+00> : vector<64xf32>
    %28 = vector.multi_reduction <add>, %27, %cst_20 [1] : vector<64x128xf32> to vector<64xf32>
    %29 = vector.shape_cast %28 : vector<64xf32> to vector<64x1xf32>
    %cst_21 = arith.constant 1.000000e-24 : f32
    %30 = vector.broadcast %cst_21 : f32 to vector<64x1xf32>
    %31 = arith.maximumf %29, %30 : vector<64x1xf32>
    %32 = math.rsqrt %31 : vector<64x1xf32>
    %33 = vector.broadcast %32 : vector<64x1xf32> to vector<64x128xf32>
    %34 = arith.mulf %26, %33 : vector<64x128xf32>
    %c0_22 = arith.constant 0 : index
    %c0_23 = arith.constant 0 : index
    %35 = vector.load %arg9[%c0_22, %c0_23] : memref<64x128xf32, #tpu.memory_space<vmem>>, vector<64x128xf32>
    tpu.vector_store %arg9[%c0_22, %c0_23], %34 {strides = array<i32>} : memref<64x128xf32, #tpu.memory_space<vmem>>, vector<64x128xf32>,
    return
  }
}

</mosaic_0001>

<llo_original>
// kernel: tpu_custom_call.1
$region0: #{tpu_custom_call.1}
  #allocation0 [shape = 'u32[]', space=smem, size = 0x4, offset = 0x4, fixed_abs, tag = 'smem constant byte address 0x4 - core index']
  #allocation1 [shape = 'u32[72,128]{1,0:T(1,128)}', space=vmem, size = 0x9000, scoped, tag = 'internal scratch']
  %s0 = inlined_call_operand.vmem [shape: bf16[64,64], index: 0, kind: input, shape index: {}]
  %s1 = inlined_call_operand.vmem [shape: bf16[64,64], index: 1, kind: input, shape index: {}]
  %s2 = inlined_call_operand.vmem [shape: f32[64,1], index: 2, kind: input, shape index: {}]
  %s3 = inlined_call_operand.vmem [shape: f32[64,1], index: 3, kind: input, shape index: {}]
  %s4 = inlined_call_operand.vmem [shape: f32[64,16], index: 4, kind: input, shape index: {}]
  %s5 = inlined_call_operand.vmem [shape: bf16[16,128], index: 5, kind: input, shape index: {}]
  %s6 = inlined_call_operand.vmem [shape: f32[1,128], index: 6, kind: input, shape index: {}]
  %s7 = inlined_call_operand.vmem [shape: bf16[128,128], index: 7, kind: input, shape index: {}]
  %s8 = inlined_call_operand.vmem [shape: f32[1,128], index: 8, kind: input, shape index: {}]
  %s9 = inlined_call_operand.hbm [shape: f32[64,128], index: 9, kind: output, shape index: {}]
  %s10 = sld [smem:[#allocation0]]
  $region46: #{tpu_custom_call.1} parent=0
    _
  %s12 = ssub.s32 1, %s10
  %s13 = scalar_select 0, %s12, %s10
  $region1: #{tpu_custom_call.1} parent=0
    #allocation2 [shape = 'u8[32768]{0}', space=vmem, size = 0x8000, scoped, tag = 'output window, operand 0, single buffered']
    #allocation3 [shape = 's32[1]{0}', space=sflag, size = 0x4, scoped, tag = 'scoped memory for tpu_custom_call.1']
    %14 = vsyncpa [#allocation3], 0
    // Predicated region
    $region2: #{tpu_custom_call.1} parent=1 // pred_check
      _
    $region3: #{tpu_custom_call.1} parent=1 // pred_check_branch
      %16 = sbr.rel (0) target = $region5
    $region4: #{tpu_custom_call.1} parent=1 // pred_region
      _
    $region5: #{tpu_custom_call.1} parent=1 // pred_fallthru
      _
    // Predicated region
    $region6: #{tpu_custom_call.1} parent=1 // pred_check
      _
    $region7: #{tpu_custom_call.1} parent=1 // pred_check_branch
      %18 = sbr.rel (0) target = $region9
    $region8: #{tpu_custom_call.1} parent=1 // pred_region
      _
    $region9: #{tpu_custom_call.1} parent=1 // pred_fallthru
      _
    // Predicated region
    $region10: #{tpu_custom_call.1} parent=1 // pred_check
      _
    $region11: #{tpu_custom_call.1} parent=1 // pred_check_branch
      %20 = sbr.rel (0) target = $region13
    $region12: #{tpu_custom_call.1} parent=1 // pred_region
      _
    $region13: #{tpu_custom_call.1} parent=1 // pred_fallthru
      _
    // Predicated region
    $region14: #{tpu_custom_call.1} parent=1 // pred_check
      _
    $region15: #{tpu_custom_call.1} parent=1 // pred_check_branch
      %22 = sbr.rel (0) target = $region17
    $region16: #{tpu_custom_call.1} parent=1 // pred_region
      _
    $region17: #{tpu_custom_call.1} parent=1 // pred_fallthru
      _
    // Predicated region
    $region18: #{tpu_custom_call.1} parent=1 // pred_check
      _
    $region19: #{tpu_custom_call.1} parent=1 // pred_check_branch
      %24 = sbr.rel (0) target = $region21
    $region20: #{tpu_custom_call.1} parent=1 // pred_region
      _
    $region21: #{tpu_custom_call.1} parent=1 // pred_fallthru
      _
    // Predicated region
    $region22: #{tpu_custom_call.1} parent=1 // pred_check
      _
    $region23: #{tpu_custom_call.1} parent=1 // pred_check_branch
      %26 = sbr.rel (0) target = $region25
    $region24: #{tpu_custom_call.1} parent=1 // pred_region
      _
    $region25: #{tpu_custom_call.1} parent=1 // pred_fallthru
      _
    // Predicated region
    $region26: #{tpu_custom_call.1} parent=1 // pred_check
      _
    $region27: #{tpu_custom_call.1} parent=1 // pred_check_branch
      %28 = sbr.rel (0) target = $region29
    $region28: #{tpu_custom_call.1} parent=1 // pred_region
      _
    $region29: #{tpu_custom_call.1} parent=1 // pred_fallthru
      _
    // Predicated region
    $region30: #{tpu_custom_call.1} parent=1 // pred_check
      _
    $region31: #{tpu_custom_call.1} parent=1 // pred_check_branch
      %30 = sbr.rel (0) target = $region33
    $region32: #{tpu_custom_call.1} parent=1 // pred_region
      _
    $region33: #{tpu_custom_call.1} parent=1 // pred_fallthru
      _
    // Predicated region
    $region34: #{tpu_custom_call.1} parent=1 // pred_check
      _
    $region35: #{tpu_custom_call.1} parent=1 // pred_check_branch
      %32 = sbr.rel (0) target = $region37
    $region36: #{tpu_custom_call.1} parent=1 // pred_region
      _
    $region37: #{tpu_custom_call.1} parent=1 // pred_fallthru
      _
    %v34 = vld [vmem:[%s4] sm:$0xff]
    %v35 = vld [vmem:[%s4 + $0x8] sm:$0xff]
    %v36 = vld [vmem:[%s4 + $0x10] sm:$0xff]
    %v37 = vld [vmem:[%s4 + $0x18] sm:$0xff]
    %v38 = vld [vmem:[%s4 + $0x20] sm:$0xff]
    %v39 = vld [vmem:[%s4 + $0x28] sm:$0xff]
    %v40 = vld [vmem:[%s4 + $0x30] sm:$0xff]
    %v41 = vld [vmem:[%s4 + $0x38] sm:$0xff]
    %v42 = vpack.c.bf16 %v35, %v34
    %v43 = vpack.c.bf16 %v37, %v36
    %v44 = vpack.c.bf16 %v39, %v38
    %v45 = vpack.c.bf16 %v41, %v40
    %v46 = vld [vmem:[%s0] sm:$0xf]
    %v47 = vld [vmem:[%s0 + $0x4] sm:$0xf]
    %v48 = vld [vmem:[%s0 + $0x8] sm:$0xf]
    %v49 = vld [vmem:[%s0 + $0xc] sm:$0xf]
    %v50 = vld [vmem:[%s0 + $0x10] sm:$0xf]
    %v51 = vld [vmem:[%s0 + $0x14] sm:$0xf]
    %v52 = vld [vmem:[%s0 + $0x18] sm:$0xf]
    %v53 = vld [vmem:[%s0 + $0x1c] sm:$0xf]
    %v54 = vld [vmem:[%s2] sm:$0xff]
    %v55 = vld [vmem:[%s2 + $0x8] sm:$0xff]
    %v56 = vld [vmem:[%s2 + $0x10] sm:$0xff]
    %v57 = vld [vmem:[%s2 + $0x18] sm:$0xff]
    %v58 = vld [vmem:[%s2 + $0x20] sm:$0xff]
    %v59 = vld [vmem:[%s2 + $0x28] sm:$0xff]
    %v60 = vld [vmem:[%s2 + $0x30] sm:$0xff]
    %v61 = vld [vmem:[%s2 + $0x38] sm:$0xff]
    %v62 = vld [vmem:[%s5] sm:$0xf]
    %v63 = vld [vmem:[%s5 + $0x4] sm:$0xf]
    %v64 = vld [vmem:[%s6] sm:$0x1]
    %v73 = vunpack.c.l.b16 %v46
    %v74 = vunpack.c.l.b16 %v47
    %v75 = vunpack.c.l.b16 %v48
    %v76 = vunpack.c.l.b16 %v49
    %v77 = vunpack.c.l.b16 %v50
    %v78 = vunpack.c.l.b16 %v51
    %v79 = vunpack.c.l.b16 %v52
    %v80 = vunpack.c.l.b16 %v53
    %v81 = vpack.c.b16 %v74, %v73
    %v82 = vpack.c.b16 %v76, %v75
    %v83 = vpack.c.b16 %v78, %v77
    %v84 = vpack.c.b16 %v80, %v79
    %vm85 = vcmask 523264
    %v87 = vsel %vm85, %v81, 0
    %v90 = vsel %vm85, %v82, 0
    %v93 = vsel %vm85, %v83, 0
    %v96 = vsel %vm85, %v84, 0
    %98 = vmatpush.bf16.msra.mxu0 0
    %99 = vmatpush.bf16.msra.mxu0 0
    %100 = vmatpush.bf16.msra.mxu0 0
    %101 = vmatpush.bf16.msra.mxu0 0
    %102 = vmatpush.bf16.msra.mxu0 %v45
    %103 = vmatpush.bf16.msra.mxu0 %v44
    %104 = vmatpush.bf16.msra.mxu0 %v43
    %105 = vmatpush.bf16.msra.mxu0 %v42
    %106 = vmatmul.bf16.gmra.mxu0 %v87
    %v107 = vpop.f32.mrf.mxu0
    %v108 = vadd.f32 0.0, %v107
    %v109 = vpop.f32.mrf.mxu0
    %v110 = vadd.f32 0.0, %v109
    %111 = vmatmul.bf16.gmra.mxu0 %v90
    %v112 = vpop.f32.mrf.mxu0
    %v113 = vadd.f32 0.0, %v112
    %v114 = vpop.f32.mrf.mxu0
    %v115 = vadd.f32 0.0, %v114
    %116 = vmatmul.bf16.gmra.mxu0 %v93
    %v117 = vpop.f32.mrf.mxu0
    %v118 = vadd.f32 0.0, %v117
    %v119 = vpop.f32.mrf.mxu0
    %v120 = vadd.f32 0.0, %v119
    %121 = vmatmul.bf16.gmra.mxu0 %v96
    %v122 = vpop.f32.mrf.mxu0
    %v123 = vadd.f32 0.0, %v122
    %v124 = vpop.f32.mrf.mxu0
    %v125 = vadd.f32 0.0, %v124
    %126 = vdwg.mxu0
    %v127 = vpack.c.bf16 %v110, %v108
    %v128 = vpack.c.bf16 %v115, %v113
    %v129 = vpack.c.bf16 %v120, %v118
    %v130 = vpack.c.bf16 %v125, %v123
    %132 = vset.pattern.permute.xlu0 0
    %133 = vperm.xlu0 %132, %v54
    %v134 = vpop.permute.xlu0 %133
    %137 = vset.pattern.permute.xlu0 0
    %138 = vperm.xlu0 %137, %v55
    %v139 = vpop.permute.xlu0 %138
    %142 = vset.pattern.permute.xlu0 0
    %143 = vperm.xlu0 %142, %v56
    %v144 = vpop.permute.xlu0 %143
    %147 = vset.pattern.permute.xlu0 0
    %148 = vperm.xlu0 %147, %v57
    %v149 = vpop.permute.xlu0 %148
    %152 = vset.pattern.permute.xlu0 0
    %153 = vperm.xlu0 %152, %v58
    %v154 = vpop.permute.xlu0 %153
    %157 = vset.pattern.permute.xlu0 0
    %158 = vperm.xlu0 %157, %v59
    %v159 = vpop.permute.xlu0 %158
    %162 = vset.pattern.permute.xlu0 0
    %163 = vperm.xlu0 %162, %v60
    %v164 = vpop.permute.xlu0 %163
    %167 = vset.pattern.permute.xlu0 0
    %168 = vperm.xlu0 %167, %v61
    %v169 = vpop.permute.xlu0 %168
    %v172 = vperm.slane %v64, 0
    %v174 = vmul.f32 %v134, %v172
    %v175 = vmul.f32 %v139, %v172
    %v176 = vmul.f32 %v144, %v172
    %v177 = vmul.f32 %v149, %v172
    %v178 = vmul.f32 %v154, %v172
    %v179 = vmul.f32 %v159, %v172
    %v180 = vmul.f32 %v164, %v172
    %v181 = vmul.f32 %v169, %v172
    %v184 = vunpack.c.l.b16 %v62
    %v185 = vunpack.c.l.b16 %v63
    %v186 = vpack.c.b16 %v185, %v184
    %vm188 = vcmask 130048
    %v190 = vsel %vm188, %v127, 0
    %v193 = vsel %vm188, %v128, 0
    %v196 = vsel %vm188, %v129, 0
    %v199 = vsel %vm188, %v130, 0
    %201 = vmatpush.bf16.msra.mxu0 0
    %202 = vmatpush.bf16.msra.mxu0 0
    %203 = vmatpush.bf16.msra.mxu0 0
    %204 = vmatpush.bf16.msra.mxu0 0
    %205 = vmatpush.bf16.msra.mxu0 0
    %206 = vmatpush.bf16.msra.mxu0 0
    %207 = vmatpush.bf16.msra.mxu0 0
    %208 = vmatpush.bf16.msra.mxu0 %v186
    %209 = vmatmul.bf16.gmra.mxu0 %v190
    %v210 = vpop.f32.mrf.mxu0
    %v211 = vadd.f32 %v174, %v210
    %v212 = vpop.f32.mrf.mxu0
    %v213 = vadd.f32 %v175, %v212
    %214 = vmatmul.bf16.gmra.mxu0 %v193
    %v215 = vpop.f32.mrf.mxu0
    %v216 = vadd.f32 %v176, %v215
    %v217 = vpop.f32.mrf.mxu0
    %v218 = vadd.f32 %v177, %v217
    %219 = vmatmul.bf16.gmra.mxu0 %v196
    %v220 = vpop.f32.mrf.mxu0
    %v221 = vadd.f32 %v178, %v220
    %v222 = vpop.f32.mrf.mxu0
    %v223 = vadd.f32 %v179, %v222
    %224 = vmatmul.bf16.gmra.mxu0 %v199
    %v225 = vpop.f32.mrf.mxu0
    %v226 = vadd.f32 %v180, %v225
    %v227 = vpop.f32.mrf.mxu0
    %v228 = vadd.f32 %v181, %v227
    %229 = vdwg.mxu0
    %vm230 = vcmp.gt.f32.partialorder %v211, 0.0
    %vm231 = vcmp.gt.f32.partialorder %v213, 0.0
    %vm232 = vcmp.gt.f32.partialorder %v216, 0.0
    %vm233 = vcmp.gt.f32.partialorder %v218, 0.0
    %vm234 = vcmp.gt.f32.partialorder %v221, 0.0
    %vm235 = vcmp.gt.f32.partialorder %v223, 0.0
    %vm236 = vcmp.gt.f32.partialorder %v226, 0.0
    %vm237 = vcmp.gt.f32.partialorder %v228, 0.0
    %v238 = vmul.f32 %v211, 0.2
    %v239 = vmul.f32 %v213, 0.2
    %v240 = vmul.f32 %v216, 0.2
    %v241 = vmul.f32 %v218, 0.2
    %v242 = vmul.f32 %v221, 0.2
    %v243 = vmul.f32 %v223, 0.2
    %v244 = vmul.f32 %v226, 0.2
    %v245 = vmul.f32 %v228, 0.2
    %v246 = vsel %vm230, %v211, %v238
    %v247 = vsel %vm231, %v213, %v239
    %v248 = vsel %vm232, %v216, %v240
    %v249 = vsel %vm233, %v218, %v241
    %v250 = vsel %vm234, %v221, %v242
    %v251 = vsel %vm235, %v223, %v243
    %v252 = vsel %vm236, %v226, %v244
    %v253 = vsel %vm237, %v228, %v245
    %v254 = vpack.c.bf16 %v247, %v246
    %v255 = vpack.c.bf16 %v249, %v248
    %v256 = vpack.c.bf16 %v251, %v250
    %v257 = vpack.c.bf16 %v253, %v252
    %v258 = vld [vmem:[%s1] sm:$0xf]
    %v259 = vld [vmem:[%s1 + $0x4] sm:$0xf]
    %v260 = vld [vmem:[%s1 + $0x8] sm:$0xf]
    %v261 = vld [vmem:[%s1 + $0xc] sm:$0xf]
    %v262 = vld [vmem:[%s1 + $0x10] sm:$0xf]
    %v263 = vld [vmem:[%s1 + $0x14] sm:$0xf]
    %v264 = vld [vmem:[%s1 + $0x18] sm:$0xf]
    %v265 = vld [vmem:[%s1 + $0x1c] sm:$0xf]
    %v266 = vld [vmem:[%s7] sm:$0xf]
    %v267 = vld [vmem:[%s7 + $0x4] sm:$0xf]
    %v268 = vld [vmem:[%s7 + $0x8] sm:$0xf]
    %v269 = vld [vmem:[%s7 + $0xc] sm:$0xf]
    %v270 = vld [vmem:[%s7 + $0x10] sm:$0xf]
    %v271 = vld [vmem:[%s7 + $0x14] sm:$0xf]
    %v272 = vld [vmem:[%s7 + $0x18] sm:$0xf]
    %v273 = vld [vmem:[%s7 + $0x1c] sm:$0xf]
    %v274 = vld [vmem:[%s7 + $0x20] sm:$0xf]
    %v275 = vld [vmem:[%s7 + $0x24] sm:$0xf]
    %v276 = vld [vmem:[%s7 + $0x28] sm:$0xf]
    %v277 = vld [vmem:[%s7 + $0x2c] sm:$0xf]
    %v278 = vld [vmem:[%s7 + $0x30] sm:$0xf]
    %v279 = vld [vmem:[%s7 + $0x34] sm:$0xf]
    %v280 = vld [vmem:[%s7 + $0x38] sm:$0xf]
    %v281 = vld [vmem:[%s7 + $0x3c] sm:$0xf]
    %v282 = vld [vmem:[%s8] sm:$0x1]
    %v284 = vperm.slane %v282, 0
    %v302 = vunpack.c.l.b16 %v266
    %v303 = vunpack.c.l.b16 %v267
    %v304 = vunpack.c.l.b16 %v268
    %v305 = vunpack.c.l.b16 %v269
    %v306 = vunpack.c.l.b16 %v270
    %v307 = vunpack.c.l.b16 %v271
    %v308 = vunpack.c.l.b16 %v272
    %v309 = vunpack.c.l.b16 %v273
    %v310 = vunpack.c.l.b16 %v274
    %v311 = vunpack.c.l.b16 %v275
    %v312 = vunpack.c.l.b16 %v276
    %v313 = vunpack.c.l.b16 %v277
    %v314 = vunpack.c.l.b16 %v278
    %v315 = vunpack.c.l.b16 %v279
    %v316 = vunpack.c.l.b16 %v280
    %v317 = vunpack.c.l.b16 %v281
    %v318 = vpack.c.b16 %v303, %v302
    %v319 = vpack.c.b16 %v305, %v304
    %v320 = vpack.c.b16 %v307, %v306
    %v321 = vpack.c.b16 %v309, %v308
    %v322 = vpack.c.b16 %v311, %v310
    %v323 = vpack.c.b16 %v313, %v312
    %v324 = vpack.c.b16 %v315, %v314
    %v325 = vpack.c.b16 %v317, %v316
    %334 = vmatpush.bf16.msra.mxu0 %v325
    %335 = vmatpush.bf16.msra.mxu0 %v324
    %336 = vmatpush.bf16.msra.mxu0 %v323
    %337 = vmatpush.bf16.msra.mxu0 %v322
    %338 = vmatpush.bf16.msra.mxu0 %v321
    %339 = vmatpush.bf16.msra.mxu0 %v320
    %340 = vmatpush.bf16.msra.mxu0 %v319
    %341 = vmatpush.bf16.msra.mxu0 %v318
    %342 = vmatmul.bf16.gmra.mxu0 %v254
    %v343 = vpop.f32.mrf.mxu0
    %v344 = vadd.f32 %v284, %v343
    %v345 = vpop.f32.mrf.mxu0
    %v346 = vadd.f32 %v284, %v345
    %347 = vmatmul.bf16.gmra.mxu0 %v255
    %v348 = vpop.f32.mrf.mxu0
    %v349 = vadd.f32 %v284, %v348
    %v350 = vpop.f32.mrf.mxu0
    %v351 = vadd.f32 %v284, %v350
    %352 = vmatmul.bf16.gmra.mxu0 %v256
    %v353 = vpop.f32.mrf.mxu0
    %v354 = vadd.f32 %v284, %v353
    %v355 = vpop.f32.mrf.mxu0
    %v356 = vadd.f32 %v284, %v355
    %357 = vmatmul.bf16.gmra.mxu0 %v257
    %v358 = vpop.f32.mrf.mxu0
    %v359 = vadd.f32 %v284, %v358
    %v360 = vpop.f32.mrf.mxu0
    %v361 = vadd.f32 %v284, %v360
    %362 = vdwg.mxu0
    %v363 = vpack.c.bf16 %v346, %v344
    %v364 = vpack.c.bf16 %v351, %v349
    %v365 = vpack.c.bf16 %v356, %v354
    %v366 = vpack.c.bf16 %v361, %v359
    %v375 = vunpack.c.l.b16 %v258
    %v376 = vunpack.c.l.b16 %v259
    %v377 = vunpack.c.l.b16 %v260
    %v378 = vunpack.c.l.b16 %v261
    %v379 = vunpack.c.l.b16 %v262
    %v380 = vunpack.c.l.b16 %v263
    %v381 = vunpack.c.l.b16 %v264
    %v382 = vunpack.c.l.b16 %v265
    %v383 = vpack.c.b16 %v376, %v375
    %v384 = vpack.c.b16 %v378, %v377
    %v385 = vpack.c.b16 %v380, %v379
    %v386 = vpack.c.b16 %v382, %v381
    %v388 = vsel %vm85, %v383, 0
    %v391 = vsel %vm85, %v384, 0
    %v394 = vsel %vm85, %v385, 0
    %v397 = vsel %vm85, %v386, 0
    %399 = vmatpush.bf16.msra.mxu0 0
    %400 = vmatpush.bf16.msra.mxu0 0
    %401 = vmatpush.bf16.msra.mxu0 0
    %402 = vmatpush.bf16.msra.mxu0 0
    %403 = vmatpush.bf16.msra.mxu0 %v366
    %404 = vmatpush.bf16.msra.mxu0 %v365
    %405 = vmatpush.bf16.msra.mxu0 %v364
    %406 = vmatpush.bf16.msra.mxu0 %v363
    %407 = vmatmul.bf16.gmra.mxu0 %v388
    %v408 = vpop.f32.mrf.mxu0
    %v409 = vadd.f32 0.0, %v408
    %v410 = vpop.f32.mrf.mxu0
    %v411 = vadd.f32 0.0, %v410
    %412 = vmatmul.bf16.gmra.mxu0 %v391
    %v413 = vpop.f32.mrf.mxu0
    %v414 = vadd.f32 0.0, %v413
    %v415 = vpop.f32.mrf.mxu0
    %v416 = vadd.f32 0.0, %v415
    %417 = vmatmul.bf16.gmra.mxu0 %v394
    %v418 = vpop.f32.mrf.mxu0
    %v419 = vadd.f32 0.0, %v418
    %v420 = vpop.f32.mrf.mxu0
    %v421 = vadd.f32 0.0, %v420
    %422 = vmatmul.bf16.gmra.mxu0 %v397
    %v423 = vpop.f32.mrf.mxu0
    %v424 = vadd.f32 0.0, %v423
    %v425 = vpop.f32.mrf.mxu0
    %v426 = vadd.f32 0.0, %v425
    %427 = vdwg.mxu0
    %v428 = vmul.f32 %v409, %v409
    %v429 = vmul.f32 %v411, %v411
    %v430 = vmul.f32 %v414, %v414
    %v431 = vmul.f32 %v416, %v416
    %v432 = vmul.f32 %v419, %v419
    %v433 = vmul.f32 %v421, %v421
    %v434 = vmul.f32 %v424, %v424
    %v435 = vmul.f32 %v426, %v426
    %436 = vadd.xlane.f32.xlu0 %v428
    %v437 = vpop.xlane.xlu0 %436
    %438 = vadd.xlane.f32.xlu0 %v429
    %v439 = vpop.xlane.xlu0 %438
    %440 = vadd.xlane.f32.xlu0 %v430
    %v441 = vpop.xlane.xlu0 %440
    %442 = vadd.xlane.f32.xlu0 %v431
    %v443 = vpop.xlane.xlu0 %442
    %444 = vadd.xlane.f32.xlu0 %v432
    %v445 = vpop.xlane.xlu0 %444
    %446 = vadd.xlane.f32.xlu0 %v433
    %v447 = vpop.xlane.xlu0 %446
    %448 = vadd.xlane.f32.xlu0 %v434
    %v449 = vpop.xlane.xlu0 %448
    %450 = vadd.xlane.f32.xlu0 %v435
    %v451 = vpop.xlane.xlu0 %450
    %v452 = vmax.f32 %v437, 1e-24
    %v453 = vmax.f32 %v439, 1e-24
    %v454 = vmax.f32 %v441, 1e-24
    %v455 = vmax.f32 %v443, 1e-24
    %v456 = vmax.f32 %v445, 1e-24
    %v457 = vmax.f32 %v447, 1e-24
    %v458 = vmax.f32 %v449, 1e-24
    %v459 = vmax.f32 %v451, 1e-24
    %v460 = vrsqrt.pop %v452
    %v461 = vmul.f32 %v460, %v452
    %v462 = vmul.f32 %v461, %v460
    %v463 = vmul.f32 0.5, %v462
    %v464 = vsub.f32 1.5, %v463
    %v465 = vmul.f32 %v460, %v464
    %vm466 = vweird.f32 %v452
    %vm467 = vweird.f32 %v460
    %vm468 = vmor %vm466, %vm467
    %v469 = vsel %vm468, %v460, %v465
    %v470 = vrsqrt.pop %v453
    %v471 = vmul.f32 %v470, %v453
    %v472 = vmul.f32 %v471, %v470
    %v473 = vmul.f32 0.5, %v472
    %v474 = vsub.f32 1.5, %v473
    %v475 = vmul.f32 %v470, %v474
    %vm476 = vweird.f32 %v453
    %vm477 = vweird.f32 %v470
    %vm478 = vmor %vm476, %vm477
    %v479 = vsel %vm478, %v470, %v475
    %v480 = vrsqrt.pop %v454
    %v481 = vmul.f32 %v480, %v454
    %v482 = vmul.f32 %v481, %v480
    %v483 = vmul.f32 0.5, %v482
    %v484 = vsub.f32 1.5, %v483
    %v485 = vmul.f32 %v480, %v484
    %vm486 = vweird.f32 %v454
    %vm487 = vweird.f32 %v480
    %vm488 = vmor %vm486, %vm487
    %v489 = vsel %vm488, %v480, %v485
    %v490 = vrsqrt.pop %v455
    %v491 = vmul.f32 %v490, %v455
    %v492 = vmul.f32 %v491, %v490
    %v493 = vmul.f32 0.5, %v492
    %v494 = vsub.f32 1.5, %v493
    %v495 = vmul.f32 %v490, %v494
    %vm496 = vweird.f32 %v455
    %vm497 = vweird.f32 %v490
    %vm498 = vmor %vm496, %vm497
    %v499 = vsel %vm498, %v490, %v495
    %v500 = vrsqrt.pop %v456
    %v501 = vmul.f32 %v500, %v456
    %v502 = vmul.f32 %v501, %v500
    %v503 = vmul.f32 0.5, %v502
    %v504 = vsub.f32 1.5, %v503
    %v505 = vmul.f32 %v500, %v504
    %vm506 = vweird.f32 %v456
    %vm507 = vweird.f32 %v500
    %vm508 = vmor %vm506, %vm507
    %v509 = vsel %vm508, %v500, %v505
    %v510 = vrsqrt.pop %v457
    %v511 = vmul.f32 %v510, %v457
    %v512 = vmul.f32 %v511, %v510
    %v513 = vmul.f32 0.5, %v512
    %v514 = vsub.f32 1.5, %v513
    %v515 = vmul.f32 %v510, %v514
    %vm516 = vweird.f32 %v457
    %vm517 = vweird.f32 %v510
    %vm518 = vmor %vm516, %vm517
    %v519 = vsel %vm518, %v510, %v515
    %v520 = vrsqrt.pop %v458
    %v521 = vmul.f32 %v520, %v458
    %v522 = vmul.f32 %v521, %v520
    %v523 = vmul.f32 0.5, %v522
    %v524 = vsub.f32 1.5, %v523
    %v525 = vmul.f32 %v520, %v524
    %vm526 = vweird.f32 %v458
    %vm527 = vweird.f32 %v520
    %vm528 = vmor %vm526, %vm527
    %v529 = vsel %vm528, %v520, %v525
    %v530 = vrsqrt.pop %v459
    %v531 = vmul.f32 %v530, %v459
    %v532 = vmul.f32 %v531, %v530
    %v533 = vmul.f32 0.5, %v532
    %v534 = vsub.f32 1.5, %v533
    %v535 = vmul.f32 %v530, %v534
    %vm536 = vweird.f32 %v459
    %vm537 = vweird.f32 %v530
    %vm538 = vmor %vm536, %vm537
    %v539 = vsel %vm538, %v530, %v535
    %v540 = vmul.f32 %v409, %v469
    %v541 = vmul.f32 %v411, %v479
    %v542 = vmul.f32 %v414, %v489
    %v543 = vmul.f32 %v416, %v499
    %v544 = vmul.f32 %v419, %v509
    %v545 = vmul.f32 %v421, %v519
    %v546 = vmul.f32 %v424, %v529
    %v547 = vmul.f32 %v426, %v539
    %548 = vst [vmem:[#allocation2] sm:$0xff] %v540
    %549 = vst [vmem:[#allocation2 + $0x8] sm:$0xff] %v541
    %550 = vst [vmem:[#allocation2 + $0x10] sm:$0xff] %v542
    %551 = vst [vmem:[#allocation2 + $0x18] sm:$0xff] %v543
    %552 = vst [vmem:[#allocation2 + $0x20] sm:$0xff] %v544
    %553 = vst [vmem:[#allocation2 + $0x28] sm:$0xff] %v545
    %554 = vst [vmem:[#allocation2 + $0x30] sm:$0xff] %v546
    %555 = vst [vmem:[#allocation2 + $0x38] sm:$0xff] %v547
    // Predicated region
    $region38: #{tpu_custom_call.1} parent=1 // pred_check
      _
    $region39: #{tpu_custom_call.1} parent=1 // pred_check_branch
      %557 = sbr.rel (0) target = $region41
    $region40: #{tpu_custom_call.1} parent=1 // pred_region
      %559 = vsyncadd [#allocation3], 0
      %s560 = sshll.u32 [#allocation2], 4
      %s561 = int_to_ptr.vmem [resolvable:$true] %s560
      %s562 = sshll.u32 %s9, 4
      %s563 = int_to_ptr.hbm [resolvable:$true] %s562
      %568 = dma.vmem_to_hbm [thread:$0]  %s561, 1024, %s563, [#allocation3], 128, 128, 8
    $region41: #{tpu_custom_call.1} parent=1 // pred_fallthru
      _
    // Predicated region
    $region42: #{tpu_custom_call.1} parent=1 // pred_check
      _
    $region43: #{tpu_custom_call.1} parent=1 // pred_check_branch
      %570 = sbr.rel (0) target = $region45
    $region44: #{tpu_custom_call.1} parent=1 // pred_region
      %572 = dma.done [#allocation3], 1024
    $region45: #{tpu_custom_call.1} parent=1 // pred_fallthru
      _
    %573 = vsyncpa [#allocation3], 1

</llo_original>
